<compile_context>
chip_gen: v5e
topology: v5e:2x2
jax: 0.10.0
libtpu: 0.0.40
codegen_flags: <defaults>
</compile_context>

<pallas_src>
import jax
import jax.numpy as jnp
from jax.experimental import pallas as pl
from jax.experimental.pallas import tpu as pltpu

LANE = 128     # padded hidden width (lane dim)
SUB = 8        # sublane granularity
KPAD = 8       # padded state_dim (fc1 contraction)
OUT_PAD = 8    # padded output width (real width is 1)
HIDDEN = 36    # real hidden width of fc1 / fc2


def _round_up(n, m):
    return ((n + m - 1) // m) * m


def mlp_kernel(x_ref, w1_ref, w2_ref, w3_ref, b12_ref, b3_ref, o_ref):
    """Fused fc1+relu -> fc2+relu -> fc3+sigmoid on one (tm, 8) batch tile."""
    # fc1 + relu : (tm,8)bf16 @ (8,128)bf16 -> (tm,128) f32 accumulate
    h = jnp.dot(x_ref[...], w1_ref[...], preferred_element_type=jnp.float32)
    h = jnp.maximum(h + b12_ref[0:1, :], 0.0)

    # fc2 + relu : (tm,128)bf16 @ (128,128)bf16 -> (tm,128) f32
    h = jnp.dot(h.astype(jnp.bfloat16), w2_ref[...],
                preferred_element_type=jnp.float32)
    h = jnp.maximum(h + b12_ref[1:2, :], 0.0)

    # fc3 + sigmoid : (tm,128)bf16 @ (128,8)bf16 -> (tm,8) f32
    h = jnp.dot(h.astype(jnp.bfloat16), w3_ref[...],
                preferred_element_type=jnp.float32)
    h = h + b3_ref[0:1, :]
    # Exact sigmoid via a single EUP tanh push.
    o_ref[...] = 0.5 * (1.0 + jnp.tanh(0.5 * h))


def mlp_forward(x, packed_params, *, max_tile=1024):
    """x: (batch, state_dim) f32 -> (batch, 1) f32 sigmoid probabilities."""
    w1p, w2p, w3p, b12, b3p = packed_params
    batch, state_dim = x.shape

    tm = min(max_tile, _round_up(batch, SUB))
    b_pad = _round_up(batch, tm)
    grid = (b_pad // tm,)

    # Pad state_dim only to 8 (sublane granularity) and ship the dominant
    # streamed operand as bf16; no 128-wide slab is materialized.
    x_pad = jnp.zeros((b_pad, KPAD), jnp.bfloat16).at[:batch, :state_dim].set(
        x.astype(jnp.bfloat16))

    out = pl.pallas_call(
        mlp_kernel,
        out_shape=jax.ShapeDtypeStruct((b_pad, OUT_PAD), jnp.float32),
        grid=grid,
        in_specs=[
            pl.BlockSpec((tm, KPAD), lambda i: (i, 0)),        # x tile (streamed)
            pl.BlockSpec((KPAD, LANE), lambda i: (0, 0)),      # w1 (resident)
            pl.BlockSpec((LANE, LANE), lambda i: (0, 0)),      # w2 (resident)
            pl.BlockSpec((LANE, OUT_PAD), lambda i: (0, 0)),   # w3 (resident)
            pl.BlockSpec((SUB, LANE), lambda i: (0, 0)),       # b1/b2 (resident)
            pl.BlockSpec((SUB, OUT_PAD), lambda i: (0, 0)),    # b3 (resident)
        ],
        out_specs=pl.BlockSpec((tm, OUT_PAD), lambda i: (i, 0)),
        compiler_params=pltpu.CompilerParams(
            dimension_semantics=("arbitrary",)),
    )(x_pad, w1p, w2p, w3p, b12, b3p)

    # Real result is column 0; padded rows/lanes are sliced away.
    return out[:batch, :1]


def init_params(key, state_dim):
    """nn.Linear-style init (uniform +/- 1/sqrt(fan_in)); unpadded f32 params."""
    dims = [(state_dim, HIDDEN), (HIDDEN, HIDDEN), (HIDDEN, 1)]
    params = []
    for i, (fan_in, fan_out) in enumerate(dims):
        kw, kb = jax.random.split(jax.random.fold_in(key, i))
        bound = 1.0 / jnp.sqrt(jnp.float32(fan_in))
        w = jax.random.uniform(kw, (fan_in, fan_out), jnp.float32, -bound, bound)
        b = jax.random.uniform(kb, (fan_out,), jnp.float32, -bound, bound)
        params.extend([w, b])
    return tuple(params)


def pack_params(params):
    """Pack params into aligned, zero-padded, MXU-friendly operands:
       w1 (8,128) bf16, w2 (128,128) bf16, w3 (128,8) bf16,
       b1/b2 in one (8,128) f32 slab, b3 in an (8,8) f32 slab."""
    w1, b1, w2, b2, w3, b3 = params
    state_dim = w1.shape[0]
    bf = jnp.bfloat16
    w1p = jnp.zeros((KPAD, LANE), bf).at[:state_dim, :HIDDEN].set(w1.astype(bf))
    w2p = jnp.zeros((LANE, LANE), bf).at[:HIDDEN, :HIDDEN].set(w2.astype(bf))
    w3p = jnp.zeros((LANE, OUT_PAD), bf).at[:HIDDEN, :1].set(w3.astype(bf))
    b12 = (jnp.zeros((SUB, LANE), jnp.float32)
           .at[0, :HIDDEN].set(b1)
           .at[1, :HIDDEN].set(b2))
    b3p = jnp.zeros((SUB, OUT_PAD), jnp.float32).at[0, 0].set(b3[0])
    return w1p, w2p, w3p, b12, b3p


def mlp_reference(x, params, matmul_dtype=jnp.float32):
    """Pure-JAX reference; matmul_dtype=bfloat16 mirrors the kernel's MXU path."""
    w1, b1, w2, b2, w3, b3 = params

    def mm(a, w):
        return jax.lax.dot(a.astype(matmul_dtype), w.astype(matmul_dtype),
                           preferred_element_type=jnp.float32)

    h = jax.nn.relu(mm(x, w1) + b1)
    h = jax.nn.relu(mm(h, w2) + b2)
    return jax.nn.sigmoid(mm(h, w3) + b3)


if __name__ == "__main__":
    key = jax.random.PRNGKey(0)
    batch, state_dim = 8, 4  # e.g. CartPole state_dim = 4
    kx, kp, kx2 = jax.random.split(key, 3)

    x = jax.random.normal(kx, (batch, state_dim), jnp.float32)
    params = init_params(kp, state_dim)
    packed = pack_params(params)

    out = jax.block_until_ready(mlp_forward(x, packed))
    assert out.shape == (batch, 1)

    # Exact structural check against a reference using the same bf16 MXU path.
    ref_bf16 = mlp_reference(x, params, matmul_dtype=jnp.bfloat16)
    assert jnp.allclose(out, ref_bf16, atol=1e-4), (out, ref_bf16)
    # Loose check against the full-f32 reference (bf16 operand quantization).
    ref_f32 = mlp_reference(x, params)
    assert jnp.allclose(out, ref_f32, atol=2e-2), (out, ref_f32)

    # Multi-tile grid + batch-padding path (still small data: 200 x 4).
    batch2 = 200
    x2 = jax.random.normal(kx2, (batch2, state_dim), jnp.float32)
    out2 = jax.block_until_ready(mlp_forward(x2, packed, max_tile=64))
    ref2 = mlp_reference(x2, params, matmul_dtype=jnp.bfloat16)
    assert out2.shape == (batch2, 1)
    assert jnp.allclose(out2, ref2, atol=1e-4), (out2, ref2)

    print("KERNEL_OK")
</pallas_src>

<mosaic_0001>
module attributes {stable_mosaic.version = 11 : i64} {
  func.func @mlp_kernel(%arg0: i32, %arg1: memref<8x8xbf16, #tpu.memory_space<vmem>>, %arg2: memref<8x128xbf16, #tpu.memory_space<vmem>>, %arg3: memref<128x128xbf16, #tpu.memory_space<vmem>>, %arg4: memref<128x8xbf16, #tpu.memory_space<vmem>>, %arg5: memref<8x128xf32, #tpu.memory_space<vmem>>, %arg6: memref<8x8xf32, #tpu.memory_space<vmem>>, %arg7: memref<8x8xf32, #tpu.memory_space<vmem>>) attributes {dimension_semantics = [#tpu.dimension_semantics<arbitrary>], iteration_bounds = array<i64: 1>, scalar_prefetch = 0 : i64, scratch_operands = 0 : i64, tpu.core_type = #tpu.core_type<tc>, window_params = [{transform_indices = @transform_0, window_bounds = array<i64: 8, 8>}, {pipeline_mode = #tpu.pipeline_mode<synchronous>, transform_indices = @transform_1, window_bounds = array<i64: 8, 128>}, {pipeline_mode = #tpu.pipeline_mode<synchronous>, transform_indices = @transform_2, window_bounds = array<i64: 128, 128>}, {pipeline_mode = #tpu.pipeline_mode<synchronous>, transform_indices = @transform_3, window_bounds = array<i64: 128, 8>}, {pipeline_mode = #tpu.pipeline_mode<synchronous>, transform_indices = @transform_4, window_bounds = array<i64: 8, 128>}, {pipeline_mode = #tpu.pipeline_mode<synchronous>, transform_indices = @transform_5, window_bounds = array<i64: 8, 8>}, {transform_indices = @transform_6, window_bounds = array<i64: 8, 8>}]} {
    %c0 = arith.constant 0 : index
    %c0_0 = arith.constant 0 : index
    %0 = vector.load %arg1[%c0, %c0_0] : memref<8x8xbf16, #tpu.memory_space<vmem>>, vector<8x8xbf16>
    %c0_1 = arith.constant 0 : index
    %c0_2 = arith.constant 0 : index
    %1 = vector.load %arg2[%c0_1, %c0_2] : memref<8x128xbf16, #tpu.memory_space<vmem>>, vector<8x128xbf16>
    %cst = arith.constant dense<0.000000e+00> : vector<8x128xf32>
    %2 = tpu.matmul %0, %1, %cst {dimension_numbers = #tpu.dot_dimension_numbers<[1], [0], [0], [1], [0, 0, 1, 1], [], []>} : vector<8x8xbf16>, vector<8x128xbf16>, vector<8x128xf32> -> vector<8x128xf32>
    %c0_3 = arith.constant 0 : index
    %c0_4 = arith.constant 0 : index
    %3 = vector.load %arg5[%c0_3, %c0_4] : memref<8x128xf32, #tpu.memory_space<vmem>>, vector<1x128xf32>
    %4 = vector.broadcast %3 : vector<1x128xf32> to vector<8x128xf32>
    %5 = arith.addf %2, %4 : vector<8x128xf32>
    %cst_5 = arith.constant 0.000000e+00 : f32
    %6 = vector.broadcast %cst_5 : f32 to vector<8x128xf32>
    %7 = arith.maximumf %5, %6 : vector<8x128xf32>
    %8 = arith.truncf %7 : vector<8x128xf32> to vector<8x128xbf16>
    %c0_6 = arith.constant 0 : index
    %c0_7 = arith.constant 0 : index
    %9 = vector.load %arg3[%c0_6, %c0_7] : memref<128x128xbf16, #tpu.memory_space<vmem>>, vector<128x128xbf16>
    %cst_8 = arith.constant dense<0.000000e+00> : vector<8x128xf32>
    %10 = tpu.matmul %8, %9, %cst_8 {dimension_numbers = #tpu.dot_dimension_numbers<[1], [0], [0], [1], [0, 0, 1, 1], [], []>} : vector<8x128xbf16>, vector<128x128xbf16>, vector<8x128xf32> -> vector<8x128xf32>
    %c1 = arith.constant 1 : index
    %c0_9 = arith.constant 0 : index
    %11 = vector.load %arg5[%c1, %c0_9] : memref<8x128xf32, #tpu.memory_space<vmem>>, vector<1x128xf32>
    %12 = vector.broadcast %11 : vector<1x128xf32> to vector<8x128xf32>
    %13 = arith.addf %10, %12 : vector<8x128xf32>
    %cst_10 = arith.constant 0.000000e+00 : f32
    %14 = vector.broadcast %cst_10 : f32 to vector<8x128xf32>
    %15 = arith.maximumf %13, %14 : vector<8x128xf32>
    %16 = arith.truncf %15 : vector<8x128xf32> to vector<8x128xbf16>
    %c0_11 = arith.constant 0 : index
    %c0_12 = arith.constant 0 : index
    %17 = vector.load %arg4[%c0_11, %c0_12] : memref<128x8xbf16, #tpu.memory_space<vmem>>, vector<128x8xbf16>
    %cst_13 = arith.constant dense<0.000000e+00> : vector<8x8xf32>
    %18 = tpu.matmul %16, %17, %cst_13 {dimension_numbers = #tpu.dot_dimension_numbers<[1], [0], [0], [1], [0, 0, 1, 1], [], []>} : vector<8x128xbf16>, vector<128x8xbf16>, vector<8x8xf32> -> vector<8x8xf32>
    %c0_14 = arith.constant 0 : index
    %c0_15 = arith.constant 0 : index
    %19 = vector.load %arg6[%c0_14, %c0_15] : memref<8x8xf32, #tpu.memory_space<vmem>>, vector<1x8xf32>
    %20 = vector.broadcast %19 : vector<1x8xf32> to vector<8x8xf32>
    %21 = arith.addf %18, %20 : vector<8x8xf32>
    %cst_16 = arith.constant 5.000000e-01 : f32
    %22 = vector.broadcast %cst_16 : f32 to vector<8x8xf32>
    %23 = arith.mulf %22, %21 : vector<8x8xf32>
    %24 = math.tanh %23 : vector<8x8xf32>
    %cst_17 = arith.constant 1.000000e+00 : f32
    %25 = vector.broadcast %cst_17 : f32 to vector<8x8xf32>
    %26 = arith.addf %25, %24 : vector<8x8xf32>
    %cst_18 = arith.constant 5.000000e-01 : f32
    %27 = vector.broadcast %cst_18 : f32 to vector<8x8xf32>
    %28 = arith.mulf %27, %26 : vector<8x8xf32>
    %c0_19 = arith.constant 0 : index
    %c0_20 = arith.constant 0 : index
    %29 = vector.load %arg7[%c0_19, %c0_20] : memref<8x8xf32, #tpu.memory_space<vmem>>, vector<8x8xf32>
    tpu.vector_store %arg7[%c0_19, %c0_20], %28 {strides = array<i32>} : memref<8x8xf32, #tpu.memory_space<vmem>>, vector<8x8xf32>,
    return
  }
  func.func @transform_0(%arg0: i32) -> (i32, i32) {
    %c0_i32 = arith.constant 0 : i32
    %c0_i32_0 = arith.constant 0 : i32
    return %arg0, %c0_i32 : i32, i32
  }
  func.func @transform_1(%arg0: i32) -> (i32, i32) {
    %c0_i32 = arith.constant 0 : i32
    %c0_i32_0 = arith.constant 0 : i32
    %c0_i32_1 = arith.constant 0 : i32
    return %c0_i32, %c0_i32_0 : i32, i32
  }
  func.func @transform_2(%arg0: i32) -> (i32, i32) {
    %c0_i32 = arith.constant 0 : i32
    %c0_i32_0 = arith.constant 0 : i32
    %c0_i32_1 = arith.constant 0 : i32
    return %c0_i32, %c0_i32_0 : i32, i32
  }
  func.func @transform_3(%arg0: i32) -> (i32, i32) {
    %c0_i32 = arith.constant 0 : i32
    %c0_i32_0 = arith.constant 0 : i32
    %c0_i32_1 = arith.constant 0 : i32
    return %c0_i32, %c0_i32_0 : i32, i32
  }
  func.func @transform_4(%arg0: i32) -> (i32, i32) {
    %c0_i32 = arith.constant 0 : i32
    %c0_i32_0 = arith.constant 0 : i32
    %c0_i32_1 = arith.constant 0 : i32
    return %c0_i32, %c0_i32_0 : i32, i32
  }
  func.func @transform_5(%arg0: i32) -> (i32, i32) {
    %c0_i32 = arith.constant 0 : i32
    %c0_i32_0 = arith.constant 0 : i32
    %c0_i32_1 = arith.constant 0 : i32
    return %c0_i32, %c0_i32_0 : i32, i32
  }
  func.func @transform_6(%arg0: i32) -> (i32, i32) {
    %c0_i32 = arith.constant 0 : i32
    %c0_i32_0 = arith.constant 0 : i32
    return %arg0, %c0_i32 : i32, i32
  }
}

</mosaic_0001>

<llo_original>
// kernel: tpu_custom_call.1
$region0: #{tpu_custom_call.1}
  #allocation0 [shape = 'u32[]', space=smem, size = 0x4, offset = 0x4, fixed_abs, tag = 'smem constant byte address 0x4 - core index']
  #allocation1 [shape = 'u32[72,128]{1,0:T(1,128)}', space=vmem, size = 0x9000, scoped, tag = 'internal scratch']
  %s0 = inlined_call_operand.hbm [shape: bf16[8,8], index: 0, kind: input, shape index: {}]
  %s1 = inlined_call_operand.hbm [shape: bf16[8,128], index: 1, kind: input, shape index: {}]
  %s2 = inlined_call_operand.vmem [shape: bf16[128,128], index: 2, kind: input, shape index: {}]
  %s3 = inlined_call_operand.vmem [shape: bf16[128,8], index: 3, kind: input, shape index: {}]
  %s4 = inlined_call_operand.hbm [shape: f32[8,128], index: 4, kind: input, shape index: {}]
  %s5 = inlined_call_operand.vmem [shape: f32[8,8], index: 5, kind: input, shape index: {}]
  %s6 = inlined_call_operand.hbm [shape: f32[8,8], index: 6, kind: output, shape index: {}]
  %s7 = sld [smem:[#allocation0]]
  $region46: #{tpu_custom_call.1} parent=0
    _
  %s9 = ssub.s32 1, %s7
  %s10 = scalar_select 0, %s9, %s7
  $region1: #{tpu_custom_call.1} parent=0
    #allocation2 [shape = 'u8[2048]{0}', space=vmem, size = 0x800, scoped, tag = 'input window, operand 0, single buffered']
    #allocation3 [shape = 's32[1]{0}', space=sflag, size = 0x4, scoped, tag = 'scoped memory for tpu_custom_call.1']
    #allocation4 [shape = 's32[1]{0}', space=sflag, size = 0x4, scoped, tag = 'scoped memory for tpu_custom_call.1']
    #allocation5 [shape = 'u8[2048]{0}', space=vmem, size = 0x800, scoped, tag = 'input window, operand 1, single buffered']
    #allocation6 [shape = 's32[1]{0}', space=sflag, size = 0x4, scoped, tag = 'scoped memory for tpu_custom_call.1']
    #allocation7 [shape = 'u8[4096]{0}', space=vmem, size = 0x1000, scoped, tag = 'input window, operand 4, single buffered']
    #allocation8 [shape = 'u8[4096]{0}', space=vmem, size = 0x1000, scoped, tag = 'output window, operand 0, single buffered']
    %11 = vsyncpa [#allocation3], 0
    %12 = vsyncpa [#allocation6], 0
    %13 = vsyncpa [#allocation4], 0
    // Predicated region
    $region2: #{tpu_custom_call.1} parent=1 // pred_check
      _
    $region3: #{tpu_custom_call.1} parent=1 // pred_check_branch
      %15 = sbr.rel (0) target = $region5
    $region4: #{tpu_custom_call.1} parent=1 // pred_region
      %17 = vsyncadd [#allocation3], 0
      %s19 = sshll.u32 %s0, 4
      %s20 = int_to_ptr.hbm [resolvable:$true] %s19
      %s21 = sshll.u32 [#allocation2], 4
      %s22 = int_to_ptr.vmem [resolvable:$true] %s21
      %24 = dma.hbm_to_vmem [thread:$0]  %s20, 64, %s22, [#allocation3]
    $region5: #{tpu_custom_call.1} parent=1 // pred_fallthru
      _
    // Predicated region
    $region6: #{tpu_custom_call.1} parent=1 // pred_check
      _
    $region7: #{tpu_custom_call.1} parent=1 // pred_check_branch
      %26 = sbr.rel (0) target = $region9
    $region8: #{tpu_custom_call.1} parent=1 // pred_region
      %28 = vsyncadd [#allocation6], 0
      %s30 = sshll.u32 %s1, 4
      %s31 = int_to_ptr.hbm [resolvable:$true] %s30
      %s32 = sshll.u32 [#allocation5], 4
      %s33 = int_to_ptr.vmem [resolvable:$true] %s32
      %35 = dma.hbm_to_vmem [thread:$0]  %s31, 64, %s33, [#allocation6]
    $region9: #{tpu_custom_call.1} parent=1 // pred_fallthru
      _
    // Predicated region
    $region10: #{tpu_custom_call.1} parent=1 // pred_check
      _
    $region11: #{tpu_custom_call.1} parent=1 // pred_check_branch
      %37 = sbr.rel (0) target = $region13
    $region12: #{tpu_custom_call.1} parent=1 // pred_region
      _
    $region13: #{tpu_custom_call.1} parent=1 // pred_fallthru
      _
    // Predicated region
    $region14: #{tpu_custom_call.1} parent=1 // pred_check
      _
    $region15: #{tpu_custom_call.1} parent=1 // pred_check_branch
      %39 = sbr.rel (0) target = $region17
    $region16: #{tpu_custom_call.1} parent=1 // pred_region
      _
    $region17: #{tpu_custom_call.1} parent=1 // pred_fallthru
      _
    // Predicated region
    $region18: #{tpu_custom_call.1} parent=1 // pred_check
      _
    $region19: #{tpu_custom_call.1} parent=1 // pred_check_branch
      %41 = sbr.rel (0) target = $region21
    $region20: #{tpu_custom_call.1} parent=1 // pred_region
      %43 = vsyncadd [#allocation6], 0
      %s45 = sshll.u32 %s4, 4
      %s46 = int_to_ptr.hbm [resolvable:$true] %s45
      %s47 = sshll.u32 [#allocation7], 4
      %s48 = int_to_ptr.vmem [resolvable:$true] %s47
      %50 = dma.hbm_to_vmem [thread:$0]  %s46, 128, %s48, [#allocation6]
    $region21: #{tpu_custom_call.1} parent=1 // pred_fallthru
      _
    // Predicated region
    $region22: #{tpu_custom_call.1} parent=1 // pred_check
      _
    $region23: #{tpu_custom_call.1} parent=1 // pred_check_branch
      %52 = sbr.rel (0) target = $region25
    $region24: #{tpu_custom_call.1} parent=1 // pred_region
      _
    $region25: #{tpu_custom_call.1} parent=1 // pred_fallthru
      _
    // Predicated region
    $region26: #{tpu_custom_call.1} parent=1 // pred_check
      _
    $region27: #{tpu_custom_call.1} parent=1 // pred_check_branch
      %54 = sbr.rel (0) target = $region29
    $region28: #{tpu_custom_call.1} parent=1 // pred_region
      %56 = dma.done [#allocation3], 64
    $region29: #{tpu_custom_call.1} parent=1 // pred_fallthru
      _
    // Predicated region
    $region30: #{tpu_custom_call.1} parent=1 // pred_check
      _
    $region31: #{tpu_custom_call.1} parent=1 // pred_check_branch
      %58 = sbr.rel (0) target = $region33
    $region32: #{tpu_custom_call.1} parent=1 // pred_region
      %60 = dma.done [#allocation6], 64
    $region33: #{tpu_custom_call.1} parent=1 // pred_fallthru
      _
    // Predicated region
    $region34: #{tpu_custom_call.1} parent=1 // pred_check
      _
    $region35: #{tpu_custom_call.1} parent=1 // pred_check_branch
      %62 = sbr.rel (0) target = $region37
    $region36: #{tpu_custom_call.1} parent=1 // pred_region
      %64 = dma.done [#allocation6], 128
    $region37: #{tpu_custom_call.1} parent=1 // pred_fallthru
      _
    %v66 = vld [vmem:[#allocation2] sm:$0xf]
    %v67 = vld [vmem:[#allocation5] sm:$0xf]
    %v68 = vld [vmem:[#allocation7] sm:$0x1]
    %v69 = vperm.slane %v68, 0
    %vm70 = vcmask 64512
    %v72 = vsel %vm70, %v66, 0
    %vm74 = vcmask 1043456
    %v76 = vsel %vm74, %v67, 0
    %78 = vmatpush.bf16.msra.mxu0 0
    %79 = vmatpush.bf16.msra.mxu0 0
    %80 = vmatpush.bf16.msra.mxu0 0
    %81 = vmatpush.bf16.msra.mxu0 0
    %82 = vmatpush.bf16.msra.mxu0 0
    %83 = vmatpush.bf16.msra.mxu0 0
    %84 = vmatpush.bf16.msra.mxu0 0
    %85 = vmatpush.bf16.msra.mxu0 %v76
    %86 = vmatmul.bf16.gmra.mxu0 %v72
    %v87 = vpop.f32.mrf.mxu0
    %v88 = vadd.f32 %v69, %v87
    %v89 = vpop.f32.mrf.mxu0
    %90 = vdwg.mxu0
    %v91 = vmax.f32 %v88, 0.0
    %v92 = vpack.c.bf16 %v91, %v91
    %v93 = vld [vmem:[%s2] sm:$0xf]
    %v94 = vld [vmem:[%s2 + $0x4] sm:$0xf]
    %v95 = vld [vmem:[%s2 + $0x8] sm:$0xf]
    %v96 = vld [vmem:[%s2 + $0xc] sm:$0xf]
    %v97 = vld [vmem:[%s2 + $0x10] sm:$0xf]
    %v98 = vld [vmem:[%s2 + $0x14] sm:$0xf]
    %v99 = vld [vmem:[%s2 + $0x18] sm:$0xf]
    %v100 = vld [vmem:[%s2 + $0x1c] sm:$0xf]
    %v101 = vld [vmem:[%s2 + $0x20] sm:$0xf]
    %v102 = vld [vmem:[%s2 + $0x24] sm:$0xf]
    %v103 = vld [vmem:[%s2 + $0x28] sm:$0xf]
    %v104 = vld [vmem:[%s2 + $0x2c] sm:$0xf]
    %v105 = vld [vmem:[%s2 + $0x30] sm:$0xf]
    %v106 = vld [vmem:[%s2 + $0x34] sm:$0xf]
    %v107 = vld [vmem:[%s2 + $0x38] sm:$0xf]
    %v108 = vld [vmem:[%s2 + $0x3c] sm:$0xf]
    %v109 = vld [vmem:[#allocation7 + $0x1] sm:$0x1]
    %v110 = vperm.slane %v109, 0
    %v127 = vunpack.c.l.b16 %v93
    %v128 = vunpack.c.l.b16 %v94
    %v129 = vunpack.c.l.b16 %v95
    %v130 = vunpack.c.l.b16 %v96
    %v131 = vunpack.c.l.b16 %v97
    %v132 = vunpack.c.l.b16 %v98
    %v133 = vunpack.c.l.b16 %v99
    %v134 = vunpack.c.l.b16 %v100
    %v135 = vunpack.c.l.b16 %v101
    %v136 = vunpack.c.l.b16 %v102
    %v137 = vunpack.c.l.b16 %v103
    %v138 = vunpack.c.l.b16 %v104
    %v139 = vunpack.c.l.b16 %v105
    %v140 = vunpack.c.l.b16 %v106
    %v141 = vunpack.c.l.b16 %v107
    %v142 = vunpack.c.l.b16 %v108
    %v143 = vpack.c.b16 %v128, %v127
    %v144 = vpack.c.b16 %v130, %v129
    %v145 = vpack.c.b16 %v132, %v131
    %v146 = vpack.c.b16 %v134, %v133
    %v147 = vpack.c.b16 %v136, %v135
    %v148 = vpack.c.b16 %v138, %v137
    %v149 = vpack.c.b16 %v140, %v139
    %v150 = vpack.c.b16 %v142, %v141
    %159 = vmatpush.bf16.msra.mxu0 %v150
    %160 = vmatpush.bf16.msra.mxu0 %v149
    %161 = vmatpush.bf16.msra.mxu0 %v148
    %162 = vmatpush.bf16.msra.mxu0 %v147
    %163 = vmatpush.bf16.msra.mxu0 %v146
    %164 = vmatpush.bf16.msra.mxu0 %v145
    %165 = vmatpush.bf16.msra.mxu0 %v144
    %166 = vmatpush.bf16.msra.mxu0 %v143
    %167 = vmatmul.bf16.gmra.mxu0 %v92
    %v168 = vpop.f32.mrf.mxu0
    %v169 = vadd.f32 %v110, %v168
    %v170 = vpop.f32.mrf.mxu0
    %171 = vdwg.mxu0
    %v172 = vmax.f32 %v169, 0.0
    %v173 = vpack.c.bf16 %v172, %v172
    %v174 = vld [vmem:[%s3] sm:$0xf]
    %v175 = vld [vmem:[%s3 + $0x4] sm:$0xf]
    %v176 = vld [vmem:[%s3 + $0x8] sm:$0xf]
    %v177 = vld [vmem:[%s3 + $0xc] sm:$0xf]
    %v178 = vld [vmem:[%s3 + $0x10] sm:$0xf]
    %v179 = vld [vmem:[%s3 + $0x14] sm:$0xf]
    %v180 = vld [vmem:[%s3 + $0x18] sm:$0xf]
    %v181 = vld [vmem:[%s3 + $0x1c] sm:$0xf]
    %v182 = vld [vmem:[%s3 + $0x20] sm:$0xf]
    %v183 = vld [vmem:[%s3 + $0x24] sm:$0xf]
    %v184 = vld [vmem:[%s3 + $0x28] sm:$0xf]
    %v185 = vld [vmem:[%s3 + $0x2c] sm:$0xf]
    %v186 = vld [vmem:[%s3 + $0x30] sm:$0xf]
    %v187 = vld [vmem:[%s3 + $0x34] sm:$0xf]
    %v188 = vld [vmem:[%s3 + $0x38] sm:$0xf]
    %v189 = vld [vmem:[%s3 + $0x3c] sm:$0xf]
    %v190 = vld [vmem:[%s5] sm:$0x1]
    %v191 = vperm.slane %v190, 0
    %v208 = vunpack.c.l.b16 %v174
    %v209 = vunpack.c.l.b16 %v175
    %v210 = vunpack.c.l.b16 %v176
    %v211 = vunpack.c.l.b16 %v177
    %v212 = vunpack.c.l.b16 %v178
    %v213 = vunpack.c.l.b16 %v179
    %v214 = vunpack.c.l.b16 %v180
    %v215 = vunpack.c.l.b16 %v181
    %v216 = vunpack.c.l.b16 %v182
    %v217 = vunpack.c.l.b16 %v183
    %v218 = vunpack.c.l.b16 %v184
    %v219 = vunpack.c.l.b16 %v185
    %v220 = vunpack.c.l.b16 %v186
    %v221 = vunpack.c.l.b16 %v187
    %v222 = vunpack.c.l.b16 %v188
    %v223 = vunpack.c.l.b16 %v189
    %v224 = vpack.c.b16 %v209, %v208
    %v225 = vpack.c.b16 %v211, %v210
    %v226 = vpack.c.b16 %v213, %v212
    %v227 = vpack.c.b16 %v215, %v214
    %v228 = vpack.c.b16 %v217, %v216
    %v229 = vpack.c.b16 %v219, %v218
    %v230 = vpack.c.b16 %v221, %v220
    %v231 = vpack.c.b16 %v223, %v222
    %240 = vmatpush.bf16.msra.mxu0 %v231
    %241 = vmatpush.bf16.msra.mxu0 %v230
    %242 = vmatpush.bf16.msra.mxu0 %v229
    %243 = vmatpush.bf16.msra.mxu0 %v228
    %244 = vmatpush.bf16.msra.mxu0 %v227
    %245 = vmatpush.bf16.msra.mxu0 %v226
    %246 = vmatpush.bf16.msra.mxu0 %v225
    %247 = vmatpush.bf16.msra.mxu0 %v224
    %248 = vmatmul.bf16.gmra.mxu0 %v173
    %v249 = vpop.f32.mrf.mxu0
    %v250 = vadd.f32 %v191, %v249
    %v251 = vpop.f32.mrf.mxu0
    %252 = vdwg.mxu0
    %v253 = vmul.f32 %v250, 0.5
    %v254 = vtanh.pop %v253
    %v255 = vadd.f32 %v254, 1.0
    %v256 = vmul.f32 %v255, 0.5
    %257 = vst.msk [vmem:[#allocation8] sm:$0xff] %vm70, %v256
    // Predicated region
    $region38: #{tpu_custom_call.1} parent=1 // pred_check
      _
    $region39: #{tpu_custom_call.1} parent=1 // pred_check_branch
      %259 = sbr.rel (0) target = $region41
    $region40: #{tpu_custom_call.1} parent=1 // pred_region
      %261 = vsyncadd [#allocation4], 0
      %s263 = sshll.u32 [#allocation8], 4
      %s264 = int_to_ptr.vmem [resolvable:$true] %s263
      %s265 = sshll.u32 %s6, 4
      %s266 = int_to_ptr.hbm [resolvable:$true] %s265
      %268 = dma.vmem_to_hbm [thread:$0]  %s264, 128, %s266, [#allocation4]
    $region41: #{tpu_custom_call.1} parent=1 // pred_fallthru
      _
    // Predicated region
    $region42: #{tpu_custom_call.1} parent=1 // pred_check
      _
    $region43: #{tpu_custom_call.1} parent=1 // pred_check_branch
      %270 = sbr.rel (0) target = $region45
    $region44: #{tpu_custom_call.1} parent=1 // pred_region
      %272 = dma.done [#allocation4], 128
    $region45: #{tpu_custom_call.1} parent=1 // pred_fallthru
      _
    %273 = vsyncpa [#allocation3], 1
    %274 = vsyncpa [#allocation6], 1
    %275 = vsyncpa [#allocation4], 1

</llo_original>
